<compile_context>
chip_gen: v7x
topology: tpu7x:2x2x1
jax: 0.10.0
libtpu: 0.0.40
codegen_flags: <defaults>
</compile_context>

<pallas_src>
import functools

import jax
import jax.numpy as jnp
import numpy as np
from jax.experimental import pallas as pl
from jax.experimental.pallas import tpu as pltpu

_LANE = 128
_SUBLANE = 8
_WIDTH_CANDIDATES = (1024, 512, 256, 128)   # lane-dense slab widths (mult. of 128)
_TILE_BYTES = 2 << 20                        # ~2 MiB f32 per pipelined block


def _quant_kernel(ql, inv_ql, signed, params_ref, x_ref, o_ref):
    """QIL transformer T_w (Eq. 3, gamma==1) / T_x (Eq. 5) + discretizer (Eq. 2).

    ql / inv_ql / signed are compile-time Python constants; alpha & beta are
    traced scalars in SMEM (they derive from the learnable c_delta/d_delta).
    clip(alpha*x + beta, 0, 1) is exactly the prune/middle/clip where-chain of
    the reference because alpha*prun+beta == 0 and alpha*clip+beta == 1.
    """
    alpha = params_ref[0]
    beta = params_ref[1]
    x = x_ref[...]
    if signed:
        # weight path: hat = clip(alpha*|x| + beta, 0, 1) * sign(x)
        ax = jnp.abs(x)
        mag = jnp.clip(alpha * ax + beta, 0.0, 1.0)
        q = jnp.round(mag * ql) * inv_ql
        o_ref[...] = jnp.where(x < 0.0, -q, q)
    else:
        # activation path: hat = clip(alpha*x + beta, 0, 1)
        hat = jnp.clip(alpha * x + beta, 0.0, 1.0)
        o_ref[...] = jnp.round(hat * ql) * inv_ql


def _launch(kernel, params, flat, rows, width):
    """Run the elementwise kernel over a (rows, width) lane-dense slab."""
    x2 = flat.reshape(rows, width)
    # ~2 MiB blocks.  tile_rows is either a multiple of 8 (partial last block
    # is masked by Pallas) or the full (possibly ragged) row extent for small
    # inputs -- both satisfy the (8, 128) block-shape rule.
    tile_rows = max(_SUBLANE, (_TILE_BYTES // (4 * width)) // _SUBLANE * _SUBLANE)
    tile_rows = min(tile_rows, rows)
    grid = (pl.cdiv(rows, tile_rows),)
    return pl.pallas_call(
        kernel,
        out_shape=jax.ShapeDtypeStruct((rows, width), jnp.float32),
        grid=grid,
        in_specs=[
            pl.BlockSpec(memory_space=pltpu.SMEM),            # [alpha, beta]
            pl.BlockSpec((tile_rows, width), lambda i: (i, 0)),
        ],
        out_specs=pl.BlockSpec((tile_rows, width), lambda i: (i, 0)),
        compiler_params=pltpu.CompilerParams(
            dimension_semantics=("parallel",)),
    )(params, x2)


def quantizer_forward(x, *, bit, name, c_delta=0.1, d_delta=0.05):
    """JAX/Pallas equivalent of Quantizer(bit, name).forward(x)."""
    if bit == 32:
        return x

    x = x.astype(jnp.float32)

    # ---- parameter clamping / derived scalars (kept traced: learnable) ----
    c = jnp.abs(jnp.asarray(c_delta, jnp.float32).reshape(()))
    d = jnp.abs(jnp.asarray(d_delta, jnp.float32).reshape(()))
    d = jnp.where(d < 0.001, d + 0.0001, d)
    c = jnp.where(c < 0.001, c + 0.0001, c)
    d = jnp.where(d > c, c, d)
    alpha = 0.5 / d
    beta = -0.5 * c / d + 0.5
    params = jnp.stack([alpha, beta]).astype(jnp.float32)

    if name == "weight":
        quant_level = float(2 ** (bit - 1) - 1)
        signed = True
    elif name == "activation":
        quant_level = float(2 ** bit - 1)
        signed = False
    else:
        raise NotImplementedError(name)
    # gamma is always 1.0 in the reference module -> specialized away at trace time.
    kernel = functools.partial(_quant_kernel, quant_level, 1.0 / quant_level, signed)

    orig_shape = x.shape
    flat = x.reshape(-1)
    n = flat.shape[0]

    # Pick the widest lane-dense slab that divides n exactly: no pad / slice
    # HBM passes for the common aligned shapes.
    for width in _WIDTH_CANDIDATES:
        if n % width == 0:
            out = _launch(kernel, params, flat, n // width, width)
            return out.reshape(orig_shape)

    # Ragged fallback: pad by at most 127 elements to the next lane multiple.
    pad = (-n) % _LANE
    padded = jnp.pad(flat, (0, pad))
    out = _launch(kernel, params, padded, padded.shape[0] // _LANE, _LANE)
    return out.reshape(-1)[:n].reshape(orig_shape)


def _reference(x, *, bit, name, c_delta=0.1, d_delta=0.05):
    """Pure-jnp reference mirroring the PyTorch module (gamma == 1.0)."""
    if bit == 32:
        return x
    c = abs(c_delta)
    d = abs(d_delta)
    if d < 0.001:
        d += 0.0001
    if c < 0.001:
        c += 0.0001
    if d > c:
        d = c
    prun, clip = c - d, c + d
    alpha, beta = 0.5 / d, -0.5 * c / d + 0.5
    x = x.astype(jnp.float32)
    if name == "weight":
        ql = 2 ** (bit - 1) - 1
        ax = jnp.abs(x)
        sgn = jnp.sign(x)
        hat = jnp.where(ax < prun, 0.0,
                        jnp.where(ax > clip, sgn, (alpha * ax + beta) * sgn))
    else:
        ql = 2 ** bit - 1
        hat = jnp.where(x < prun, 0.0,
                        jnp.where(x > clip, 1.0, alpha * x + beta))
    return jnp.round(hat * ql) / ql


if __name__ == "__main__":
    key = jax.random.PRNGKey(0)
    kw, ka, kb, kc, kd = jax.random.split(key, 5)

    # conv weight (OIHW) and NCHW activations, as PyTorch would supply.
    w = 0.3 * jax.random.normal(kw, (4, 4, 3, 3), dtype=jnp.float32)       # ragged (144 elems)
    x = 0.3 * jax.random.normal(ka, (2, 4, 16, 16), dtype=jnp.float32)     # 2048 -> 1024-wide slab
    x_wide = 0.3 * jax.random.normal(kb, (2, 32, 16, 16), dtype=jnp.float32)  # 16384 -> wide slab
    x_big = 0.3 * jax.random.normal(kc, (16, 64, 32, 32), dtype=jnp.float32)  # 1M elems -> multi-block grid
    x_rag = 0.3 * jax.random.normal(kd, (700, 1024), dtype=jnp.float32)       # partial last block on rows

    cases = [
        (w, 4, "weight"),
        (w, 3, "weight"),
        (x, 4, "activation"),
        (x_wide, 4, "activation"),
        (x_big, 4, "activation"),
        (x_rag, 4, "activation"),
    ]
    for arr, bit, name in cases:
        got = quantizer_forward(arr, bit=bit, name=name)
        jax.block_until_ready(got)
        want = _reference(arr, bit=bit, name=name)
        np.testing.assert_allclose(np.asarray(got), np.asarray(want),
                                   rtol=1e-6, atol=1e-6)

    # bit == 32 passthrough path
    assert quantizer_forward(x, bit=32, name="activation") is x

    # TODO(synk): Discretizer's STE backward (gradient gating) is training-only
    # and not part of this forward kernel.
    print("KERNEL_OK")
</pallas_src>

<mosaic_0001>
module attributes {stable_mosaic.version = 11 : i64} {
  func.func @_quant_kernel(%arg0: i32, %arg1: memref<2xf32, #tpu.memory_space<smem>>, %arg2: memref<2x128xf32, #tpu.memory_space<vmem>>, %arg3: memref<2x128xf32, #tpu.memory_space<vmem>>) attributes {dimension_semantics = [#tpu.dimension_semantics<parallel>], iteration_bounds = array<i64: 1>, scalar_prefetch = 0 : i64, scratch_operands = 0 : i64, tpu.core_type = #tpu.core_type<tc>, window_params = [{transform_indices = @transform_0, window_bounds = array<i64: 2>}, {transform_indices = @transform_1, window_bounds = array<i64: 2, 128>}, {transform_indices = @transform_2, window_bounds = array<i64: 2, 128>}]} {
    %c0 = arith.constant 0 : index
    %0 = memref.load %arg1[%c0] : memref<2xf32, #tpu.memory_space<smem>>
    %c1 = arith.constant 1 : index
    %1 = memref.load %arg1[%c1] : memref<2xf32, #tpu.memory_space<smem>>
    %c0_0 = arith.constant 0 : index
    %c0_1 = arith.constant 0 : index
    %2 = vector.load %arg2[%c0_0, %c0_1] : memref<2x128xf32, #tpu.memory_space<vmem>>, vector<2x128xf32>
    %3 = math.absf %2 : vector<2x128xf32>
    %4 = vector.broadcast %0 : f32 to vector<2x128xf32>
    %5 = arith.mulf %4, %3 : vector<2x128xf32>
    %6 = vector.broadcast %1 : f32 to vector<2x128xf32>
    %7 = arith.addf %5, %6 : vector<2x128xf32>
    %cst = arith.constant 0.000000e+00 : f32
    %cst_2 = arith.constant 1.000000e+00 : f32
    %8 = vector.broadcast %cst : f32 to vector<2x128xf32>
    %9 = arith.maximumf %8, %7 : vector<2x128xf32>
    %10 = vector.broadcast %cst_2 : f32 to vector<2x128xf32>
    %11 = arith.minimumf %10, %9 : vector<2x128xf32>
    %cst_3 = arith.constant 7.000000e+00 : f32
    %12 = vector.broadcast %cst_3 : f32 to vector<2x128xf32>
    %13 = arith.mulf %11, %12 : vector<2x128xf32>
    %14 = math.roundeven %13 : vector<2x128xf32>
    %cst_4 = arith.constant 0.142857149 : f32
    %15 = vector.broadcast %cst_4 : f32 to vector<2x128xf32>
    %16 = arith.mulf %14, %15 : vector<2x128xf32>
    %cst_5 = arith.constant 0.000000e+00 : f32
    %17 = vector.broadcast %cst_5 : f32 to vector<2x128xf32>
    %18 = arith.cmpf olt, %2, %17 : vector<2x128xf32>
    %cst_6 = arith.constant 0.000000e+00 : f32
    %19 = vector.broadcast %cst_6 : f32 to vector<2x128xf32>
    %20 = arith.subf %19, %16 : vector<2x128xf32>
    %21 = arith.select %18, %20, %16 : vector<2x128xi1>, vector<2x128xf32>
    %c0_7 = arith.constant 0 : index
    %c0_8 = arith.constant 0 : index
    %22 = vector.load %arg3[%c0_7, %c0_8] : memref<2x128xf32, #tpu.memory_space<vmem>>, vector<2x128xf32>
    tpu.vector_store %arg3[%c0_7, %c0_8], %21 {strides = array<i32>} : memref<2x128xf32, #tpu.memory_space<vmem>>, vector<2x128xf32>,
    return
  }
  func.func @transform_0(%arg0: i32) -> i32 {
    %c0_i32 = arith.constant 0 : i32
    %c0_i32_0 = arith.constant 0 : i32
    return %c0_i32 : i32
  }
  func.func @transform_1(%arg0: i32) -> (i32, i32) {
    %c0_i32 = arith.constant 0 : i32
    %c0_i32_0 = arith.constant 0 : i32
    return %arg0, %c0_i32 : i32, i32
  }
  func.func @transform_2(%arg0: i32) -> (i32, i32) {
    %c0_i32 = arith.constant 0 : i32
    %c0_i32_0 = arith.constant 0 : i32
    return %arg0, %c0_i32 : i32, i32
  }
}

</mosaic_0001>

<llo_original>
// kernel: tpu_custom_call.1
$region0: #{tpu_custom_call.1}
  #allocation0 [shape = 'u32[]', space=smem, size = 0x4, offset = 0x4, fixed_abs, tag = 'smem constant byte address 0x4 - core index']
  #allocation1 [shape = 'u32[144,128]{1,0:T(1,128)}', space=vmem, size = 0x12000, scoped, tag = 'internal scratch']
  %s0 = inlined_call_operand.hbm [shape: f32[2], index: 0, kind: input, shape index: {}]
  %s1 = inlined_call_operand.vmem [shape: f32[2,128], index: 1, kind: input, shape index: {}]
  %s2 = inlined_call_operand.hbm [shape: f32[2,128], index: 2, kind: output, shape index: {}]
  %s3 = sld [smem:[#allocation0]]
  $region22: #{tpu_custom_call.1} parent=0
    _
  %s5 = ssub.s32 1, %s3
  %s6 = scalar_select 0, %s5, %s3
  $region1: #{tpu_custom_call.1} parent=0
    #allocation2 [shape = 'u8[512]{0}', space=smem, size = 0x200, scoped, tag = 'input window, operand 0, single buffered']
    #allocation3 [shape = 's32[1]{0}', space=sflag, size = 0x4, scoped, tag = 'scoped memory for tpu_custom_call.1']
    #allocation4 [shape = 's32[1]{0}', space=sflag, size = 0x4, scoped, tag = 'scoped memory for tpu_custom_call.1']
    #allocation5 [shape = 'u8[1024]{0}', space=vmem, size = 0x400, scoped, tag = 'output window, operand 0, single buffered']
    %7 = vsyncpa [#allocation4], 0
    %8 = vsyncpa [#allocation3], 0
    // Predicated region
    $region2: #{tpu_custom_call.1} parent=1 // pred_check
      _
    $region3: #{tpu_custom_call.1} parent=1 // pred_check_branch
      %10 = sbr.rel (0) target = $region5
    $region4: #{tpu_custom_call.1} parent=1 // pred_region
      %s12 = ssub.s32 16, 16
      %13 = vsyncadd [#allocation4], %s12
      %16 = dma.hbm_to_smem %s0, 16, [#allocation2], [#allocation4]
    $region5: #{tpu_custom_call.1} parent=1 // pred_fallthru
      _
    // Predicated region
    $region6: #{tpu_custom_call.1} parent=1 // pred_check
      _
    $region7: #{tpu_custom_call.1} parent=1 // pred_check_branch
      %18 = sbr.rel (0) target = $region9
    $region8: #{tpu_custom_call.1} parent=1 // pred_region
      _
    $region9: #{tpu_custom_call.1} parent=1 // pred_fallthru
      _
    // Predicated region
    $region10: #{tpu_custom_call.1} parent=1 // pred_check
      _
    $region11: #{tpu_custom_call.1} parent=1 // pred_check_branch
      %20 = sbr.rel (0) target = $region13
    $region12: #{tpu_custom_call.1} parent=1 // pred_region
      %21 = dma.done [#allocation4], 16
    $region13: #{tpu_custom_call.1} parent=1 // pred_fallthru
      _
    %22 = sfence
    %s23 = sld [smem:[#allocation2]]
    %s24 = sld [smem:[#allocation2 + $0x1]]
    %v25 = vld [vmem:[%s1] sm:$0x3]
    %v26 = vand.u32 2147483647, %v25
    %v27 = vstv %s23
    %v28 = vmul.f32 %v27, %v26
    %v29 = vstv %s24
    %v30 = vadd.f32 %v28, %v29
    %v31 = vmax.f32 %v30, 0.0
    %v32 = vmin.f32 %v31, 1.0
    %v33 = vmul.f32 %v32, 7.0
    %v34 = vround.ne.pseudo %v33
    %v35 = vmul.f32 %v34, 0.14285715
    %vm36 = vcmp.lt.f32.partialorder %v25, 0.0
    %v37 = vsub.f32 0.0, %v35
    %v38 = vsel %vm36, %v37, %v35
    %39 = vst [vmem:[#allocation5] sm:$0x3] %v38
    // Predicated region
    $region14: #{tpu_custom_call.1} parent=1 // pred_check
      _
    $region15: #{tpu_custom_call.1} parent=1 // pred_check_branch
      %41 = sbr.rel (0) target = $region17
    $region16: #{tpu_custom_call.1} parent=1 // pred_region
      %s43 = ssub.s32 32, 32
      %44 = vsyncadd [#allocation3], %s43
      %s46 = sshll.u32 [#allocation5], 4
      %s47 = int_to_ptr.vmem [resolvable:$true] %s46
      %49 = dma.vmem_to_hbm [thread:$0]  %s47, 32, %s2, [#allocation3]
    $region17: #{tpu_custom_call.1} parent=1 // pred_fallthru
      _
    // Predicated region
    $region18: #{tpu_custom_call.1} parent=1 // pred_check
      _
    $region19: #{tpu_custom_call.1} parent=1 // pred_check_branch
      %51 = sbr.rel (0) target = $region21
    $region20: #{tpu_custom_call.1} parent=1 // pred_region
      %52 = dma.done [#allocation3], 32
    $region21: #{tpu_custom_call.1} parent=1 // pred_fallthru
      _
    %53 = vsyncpa [#allocation3], 1
    %54 = vsyncpa [#allocation4], 1

</llo_original>
